<compile_context>
chip_gen: v7x
topology: tpu7x:2x2x1
jax: 0.10.0
libtpu: 0.0.40
codegen_flags: <defaults>
</compile_context>

<pallas_src>
import functools
import math

import jax
import jax.numpy as jnp
from jax.experimental import pallas as pl
from jax.experimental.pallas import tpu as pltpu

# ----------------------------- dimensions ----------------------------------
B = 2             # batch
D_IN = 16         # input feature dim (input_encoder)
HIDDEN = 32       # hidden width
LATENT = 32       # latent / set-encoder output dim
SET_C = 4         # channels per set element
SET_N = 8         # number of elements in the target set
MAX_SET_SIZE = 8  # decoded set size
PRED_W = SET_C * MAX_SET_SIZE   # 32
OUT_W = 128                     # lane-dense output slab width
PACK_ROWS = 128                 # packed-parameter slab rows (8-aligned sections)

_VMEM = pl.BlockSpec(memory_space=pltpu.MemorySpace.VMEM)  # whole array in VMEM

# Packed parameter slab layout ([PACK_ROWS, 32], all sections start 8-aligned):
#   rows   0- 15 : ie_w1 (D_IN,   HIDDEN)
#   rows  16- 47 : ie_w2 (HIDDEN, LATENT)
#   rows  48- 51 : se_w1 (SET_C,  HIDDEN)      rows 52-55: zero pad
#   rows  56- 87 : se_w2 (HIDDEN, LATENT)
#   rows  88-119 : de_w  (LATENT, PRED_W)
#   rows 120-124 : biases ie_b1, ie_b2, se_b1, se_b2, de_b (one row each)
#   rows 125-127 : zero pad


# ----------------------------- fused kernel ---------------------------------
def _net_fused_kernel(x_ref, s_ref, p_ref, o_ref):
    # x_ref: [B, D_IN]   s_ref: [B*N, C]   p_ref: [128, 32]   o_ref: [B, 128]
    x = x_ref[...]
    s = s_ref[...]

    ie_w1 = p_ref[0:16, :]        # (D_IN, HIDDEN)
    ie_w2 = p_ref[16:48, :]       # (HIDDEN, LATENT)
    se_w1 = p_ref[48:52, :]       # (SET_C, HIDDEN)
    se_w2 = p_ref[56:88, :]       # (HIDDEN, LATENT)
    de_w = p_ref[88:120, :]       # (LATENT, PRED_W)
    bias = p_ref[120:125, :]      # 5 bias rows (8-aligned block, one load)
    ie_b1, ie_b2 = bias[0:1, :], bias[1:2, :]
    se_b1, se_b2 = bias[2:3, :], bias[3:4, :]
    de_b = bias[4:5, :]

    # input_encoder: Linear -> ReLU -> Linear
    h = jnp.maximum(
        jnp.dot(x, ie_w1, preferred_element_type=jnp.float32) + ie_b1, 0.0)
    latent = jnp.dot(h, ie_w2, preferred_element_type=jnp.float32) + ie_b2   # [B, L]

    # set_encoder: per-element Conv1d(k=1) -> ReLU, pool over set BEFORE second
    # (linear) layer.  sum_n (g_n @ W2 + b2) == (sum_n g_n) @ W2 + N*b2.
    g = jnp.maximum(
        jnp.dot(s, se_w1, preferred_element_type=jnp.float32) + se_b1, 0.0)  # [B*N, H]
    pooled = jnp.concatenate(
        [jnp.sum(g[b * SET_N:(b + 1) * SET_N, :], axis=0, keepdims=True)
         for b in range(B)],
        axis=0)                                                              # [B, H]
    target = (jnp.dot(pooled, se_w2, preferred_element_type=jnp.float32)
              + jnp.float32(SET_N) * se_b2)                                  # [B, L]

    # set_decoder: single Linear(latent -> C * max_set_size)
    pred = jnp.dot(latent, de_w, preferred_element_type=jnp.float32) + de_b  # [B, PRED_W]

    # One lane-dense [B, 128] output slab: pred | latent | target | zero pad.
    pad = jnp.zeros((pred.shape[0], OUT_W - PRED_W - 2 * LATENT), jnp.float32)
    o_ref[...] = jnp.concatenate([pred, latent, target, pad],
                                 axis=-1).astype(o_ref.dtype)


# ----------------------------- wrapper ---------------------------------------
@functools.partial(jax.jit, static_argnums=(3,))
def net_forward(param_slab, inp, target_set, max_set_size):
    # Mirrors Net.forward (input_encoder is not None branch).
    assert max_set_size == MAX_SET_SIZE
    bsz = inp.shape[0]
    s_flat = target_set.reshape(bsz * SET_N, SET_C)       # channels-last, flattened

    slab = pl.pallas_call(
        _net_fused_kernel,
        out_shape=jax.ShapeDtypeStruct((bsz, OUT_W), jnp.float32),
        in_specs=[_VMEM, _VMEM, _VMEM],
        out_specs=_VMEM,
    )(inp, s_flat, param_slab)

    predicted_flat = slab[:, :PRED_W]
    latent_repr = slab[:, PRED_W:PRED_W + LATENT]
    target_repr = slab[:, PRED_W + LATENT:PRED_W + 2 * LATENT]
    # predicted set in the PyTorch set convention [B, C, max_set_size]
    predicted_set = predicted_flat.reshape(bsz, SET_C, max_set_size)
    return predicted_set, (latent_repr, target_repr)


# ----------------------------- parameter init -------------------------------
def _xavier_uniform(key, fan_in, fan_out, shape):
    bound = math.sqrt(6.0 / (fan_in + fan_out))
    return jax.random.uniform(key, shape, jnp.float32, -bound, bound)


def init_params(key):
    ks = jax.random.split(key, 5)
    # Weights stored as (in, out) for x @ W; xavier_uniform is symmetric so the
    # distribution matches PyTorch's (out, in) init. Biases zero (Net.__init__).
    return {
        "ie_w1": _xavier_uniform(ks[0], D_IN, HIDDEN, (D_IN, HIDDEN)),
        "ie_b1": jnp.zeros((1, HIDDEN), jnp.float32),
        "ie_w2": _xavier_uniform(ks[1], HIDDEN, LATENT, (HIDDEN, LATENT)),
        "ie_b2": jnp.zeros((1, LATENT), jnp.float32),
        "se_w1": _xavier_uniform(ks[2], SET_C, HIDDEN, (SET_C, HIDDEN)),
        "se_b1": jnp.zeros((1, HIDDEN), jnp.float32),
        "se_w2": _xavier_uniform(ks[3], HIDDEN, LATENT, (HIDDEN, LATENT)),
        "se_b2": jnp.zeros((1, LATENT), jnp.float32),
        "de_w": _xavier_uniform(ks[4], LATENT, PRED_W, (LATENT, PRED_W)),
        "de_b": jnp.zeros((1, PRED_W), jnp.float32),
    }


def pack_params(p):
    """Pack all weights/biases into one lane-aligned [128, 32] VMEM slab."""
    slab = jnp.zeros((PACK_ROWS, 32), jnp.float32)
    slab = slab.at[0:16, :].set(p["ie_w1"])
    slab = slab.at[16:48, :].set(p["ie_w2"])
    slab = slab.at[48:52, :].set(p["se_w1"])
    slab = slab.at[56:88, :].set(p["se_w2"])
    slab = slab.at[88:120, :].set(p["de_w"])
    slab = slab.at[120, :].set(p["ie_b1"][0])
    slab = slab.at[121, :].set(p["ie_b2"][0])
    slab = slab.at[122, :].set(p["se_b1"][0])
    slab = slab.at[123, :].set(p["se_b2"][0])
    slab = slab.at[124, :].set(p["de_b"][0])
    return slab


# ----------------------------- pure-JAX reference ----------------------------
def _ref_forward(p, inp, target_set):
    h = jnp.maximum(inp @ p["ie_w1"] + p["ie_b1"], 0.0)
    latent = h @ p["ie_w2"] + p["ie_b2"]
    g = jnp.maximum(jnp.einsum("bnc,ch->bnh", target_set, p["se_w1"]) + p["se_b1"], 0.0)
    e = jnp.einsum("bnh,hl->bnl", g, p["se_w2"]) + p["se_b2"]
    target = jnp.sum(e, axis=1)
    pred = (latent @ p["de_w"] + p["de_b"]).reshape(inp.shape[0], SET_C, MAX_SET_SIZE)
    return pred, latent, target


# TODO(synk): the original DSPN set_decoder performs an inner gradient-descent
# loop through the set encoder (autograd inside forward); here a single-Linear
# decoder (the MLP baseline decoder) is implemented instead.

# ----------------------------- main ------------------------------------------
if __name__ == "__main__":
    key = jax.random.PRNGKey(0)
    k_param, k_in, k_set = jax.random.split(key, 3)

    params = init_params(k_param)
    param_slab = pack_params(params)
    inp = jax.random.normal(k_in, (B, D_IN), jnp.float32)                   # input
    target_set = jax.random.normal(k_set, (B, SET_N, SET_C), jnp.float32)   # [B, N, C]

    predicted_set, (latent_repr, target_repr) = net_forward(
        param_slab, inp, target_set, MAX_SET_SIZE)
    jax.block_until_ready((predicted_set, latent_repr, target_repr))

    assert predicted_set.shape == (B, SET_C, MAX_SET_SIZE)
    assert latent_repr.shape == (B, LATENT)
    assert target_repr.shape == (B, LATENT)

    # numerical check vs un-fused pure-JAX reference (validates param packing,
    # flattened dot, and pool-before-matmul rewrite)
    ref_pred, ref_latent, ref_target = _ref_forward(params, inp, target_set)
    assert jnp.allclose(predicted_set, ref_pred, atol=1e-5, rtol=1e-5)
    assert jnp.allclose(latent_repr, ref_latent, atol=1e-5, rtol=1e-5)
    assert jnp.allclose(target_repr, ref_target, atol=1e-5, rtol=1e-5)

    print("KERNEL_OK")
</pallas_src>

<mosaic_0001>
module attributes {stable_mosaic.version = 11 : i64} {
  func.func @_net_fused_kernel(%arg0: memref<2x16xf32, #tpu.memory_space<vmem>>, %arg1: memref<16x4xf32, #tpu.memory_space<vmem>>, %arg2: memref<128x32xf32, #tpu.memory_space<vmem>>, %arg3: memref<2x128xf32, #tpu.memory_space<vmem>>) attributes {dimension_semantics = [], scalar_prefetch = 0 : i64, scratch_operands = 0 : i64, tpu.core_type = #tpu.core_type<tc>} {
    %c0 = arith.constant 0 : index
    %c0_0 = arith.constant 0 : index
    %0 = vector.load %arg0[%c0, %c0_0] : memref<2x16xf32, #tpu.memory_space<vmem>>, vector<2x16xf32>
    %c0_1 = arith.constant 0 : index
    %c0_2 = arith.constant 0 : index
    %1 = vector.load %arg1[%c0_1, %c0_2] : memref<16x4xf32, #tpu.memory_space<vmem>>, vector<16x4xf32>
    %c0_3 = arith.constant 0 : index
    %c0_4 = arith.constant 0 : index
    %2 = vector.load %arg2[%c0_3, %c0_4] : memref<128x32xf32, #tpu.memory_space<vmem>>, vector<16x32xf32>
    %c16 = arith.constant 16 : index
    %c0_5 = arith.constant 0 : index
    %3 = vector.load %arg2[%c16, %c0_5] : memref<128x32xf32, #tpu.memory_space<vmem>>, vector<32x32xf32>
    %c48 = arith.constant 48 : index
    %c0_6 = arith.constant 0 : index
    %4 = vector.load %arg2[%c48, %c0_6] : memref<128x32xf32, #tpu.memory_space<vmem>>, vector<4x32xf32>
    %c56 = arith.constant 56 : index
    %c0_7 = arith.constant 0 : index
    %5 = vector.load %arg2[%c56, %c0_7] : memref<128x32xf32, #tpu.memory_space<vmem>>, vector<32x32xf32>
    %c88 = arith.constant 88 : index
    %c0_8 = arith.constant 0 : index
    %6 = vector.load %arg2[%c88, %c0_8] : memref<128x32xf32, #tpu.memory_space<vmem>>, vector<32x32xf32>
    %c120 = arith.constant 120 : index
    %c0_9 = arith.constant 0 : index
    %7 = vector.load %arg2[%c120, %c0_9] : memref<128x32xf32, #tpu.memory_space<vmem>>, vector<5x32xf32>
    %8 = vector.extract_strided_slice %7 {offsets = [0, 0], sizes = [1, 32], strides = [1, 1]} : vector<5x32xf32> to vector<1x32xf32>
    %9 = vector.extract_strided_slice %7 {offsets = [1, 0], sizes = [1, 32], strides = [1, 1]} : vector<5x32xf32> to vector<1x32xf32>
    %10 = vector.extract_strided_slice %7 {offsets = [2, 0], sizes = [1, 32], strides = [1, 1]} : vector<5x32xf32> to vector<1x32xf32>
    %11 = vector.extract_strided_slice %7 {offsets = [3, 0], sizes = [1, 32], strides = [1, 1]} : vector<5x32xf32> to vector<1x32xf32>
    %12 = vector.extract_strided_slice %7 {offsets = [4, 0], sizes = [1, 32], strides = [1, 1]} : vector<5x32xf32> to vector<1x32xf32>
    %cst = arith.constant dense<0.000000e+00> : vector<2x32xf32>
    %13 = tpu.matmul %0, %2, %cst {dimension_numbers = #tpu.dot_dimension_numbers<[1], [0], [0], [1], [0, 0, 1, 1], [], []>} : vector<2x16xf32>, vector<16x32xf32>, vector<2x32xf32> -> vector<2x32xf32>
    %14 = vector.broadcast %8 : vector<1x32xf32> to vector<2x32xf32>
    %15 = arith.addf %13, %14 : vector<2x32xf32>
    %cst_10 = arith.constant 0.000000e+00 : f32
    %16 = vector.broadcast %cst_10 : f32 to vector<2x32xf32>
    %17 = arith.maximumf %15, %16 : vector<2x32xf32>
    %cst_11 = arith.constant dense<0.000000e+00> : vector<2x32xf32>
    %18 = tpu.matmul %17, %3, %cst_11 {dimension_numbers = #tpu.dot_dimension_numbers<[1], [0], [0], [1], [0, 0, 1, 1], [], []>} : vector<2x32xf32>, vector<32x32xf32>, vector<2x32xf32> -> vector<2x32xf32>
    %19 = vector.broadcast %9 : vector<1x32xf32> to vector<2x32xf32>
    %20 = arith.addf %18, %19 : vector<2x32xf32>
    %cst_12 = arith.constant dense<0.000000e+00> : vector<16x32xf32>
    %21 = tpu.matmul %1, %4, %cst_12 {dimension_numbers = #tpu.dot_dimension_numbers<[1], [0], [0], [1], [0, 0, 1, 1], [], []>} : vector<16x4xf32>, vector<4x32xf32>, vector<16x32xf32> -> vector<16x32xf32>
    %22 = vector.broadcast %10 : vector<1x32xf32> to vector<16x32xf32>
    %23 = arith.addf %21, %22 : vector<16x32xf32>
    %cst_13 = arith.constant 0.000000e+00 : f32
    %24 = vector.broadcast %cst_13 : f32 to vector<16x32xf32>
    %25 = arith.maximumf %23, %24 : vector<16x32xf32>
    %26 = vector.extract_strided_slice %25 {offsets = [0, 0], sizes = [8, 32], strides = [1, 1]} : vector<16x32xf32> to vector<8x32xf32>
    %cst_14 = arith.constant dense<0.000000e+00> : vector<32xf32>
    %27 = vector.multi_reduction <add>, %26, %cst_14 [0] : vector<8x32xf32> to vector<32xf32>
    %28 = vector.shape_cast %27 : vector<32xf32> to vector<1x32xf32>
    %29 = vector.extract_strided_slice %25 {offsets = [8, 0], sizes = [8, 32], strides = [1, 1]} : vector<16x32xf32> to vector<8x32xf32>
    %cst_15 = arith.constant dense<0.000000e+00> : vector<32xf32>
    %30 = vector.multi_reduction <add>, %29, %cst_15 [0] : vector<8x32xf32> to vector<32xf32>
    %31 = vector.shape_cast %30 : vector<32xf32> to vector<1x32xf32>
    %32 = tpu.concatenate %28, %31 in 0 : vector<1x32xf32>, vector<1x32xf32> -> vector<2x32xf32>
    %cst_16 = arith.constant dense<0.000000e+00> : vector<2x32xf32>
    %33 = tpu.matmul %32, %5, %cst_16 {dimension_numbers = #tpu.dot_dimension_numbers<[1], [0], [0], [1], [0, 0, 1, 1], [], []>} : vector<2x32xf32>, vector<32x32xf32>, vector<2x32xf32> -> vector<2x32xf32>
    %cst_17 = arith.constant 8.000000e+00 : f32
    %34 = vector.broadcast %cst_17 : f32 to vector<1x32xf32>
    %35 = arith.mulf %34, %11 : vector<1x32xf32>
    %36 = vector.broadcast %35 : vector<1x32xf32> to vector<2x32xf32>
    %37 = arith.addf %33, %36 : vector<2x32xf32>
    %cst_18 = arith.constant dense<0.000000e+00> : vector<2x32xf32>
    %38 = tpu.matmul %20, %6, %cst_18 {dimension_numbers = #tpu.dot_dimension_numbers<[1], [0], [0], [1], [0, 0, 1, 1], [], []>} : vector<2x32xf32>, vector<32x32xf32>, vector<2x32xf32> -> vector<2x32xf32>
    %39 = vector.broadcast %12 : vector<1x32xf32> to vector<2x32xf32>
    %40 = arith.addf %38, %39 : vector<2x32xf32>
    %cst_19 = arith.constant 0.000000e+00 : f32
    %41 = vector.broadcast %cst_19 : f32 to vector<2x32xf32>
    %42 = tpu.concatenate %40, %20, %37, %41 in 1 : vector<2x32xf32>, vector<2x32xf32>, vector<2x32xf32>, vector<2x32xf32> -> vector<2x128xf32>
    %c0_20 = arith.constant 0 : index
    %c0_21 = arith.constant 0 : index
    %43 = vector.load %arg3[%c0_20, %c0_21] : memref<2x128xf32, #tpu.memory_space<vmem>>, vector<2x128xf32>
    tpu.vector_store %arg3[%c0_20, %c0_21], %42 {strides = array<i32>} : memref<2x128xf32, #tpu.memory_space<vmem>>, vector<2x128xf32>,
    return
  }
}

</mosaic_0001>

<llo_original>
// kernel: net_forward.1
$region0: #{net_forward.1}
  #allocation0 [shape = 'u32[]', space=smem, size = 0x4, offset = 0x4, fixed_abs, tag = 'smem constant byte address 0x4 - core index']
  #allocation1 [shape = 'u32[144,128]{1,0:T(1,128)}', space=vmem, size = 0x12000, scoped, tag = 'internal scratch']
  %s0 = inlined_call_operand.vmem [shape: f32[2,16], index: 0, kind: input, shape index: {}]
  %s1 = inlined_call_operand.vmem [shape: f32[16,4], index: 1, kind: input, shape index: {}]
  %s2 = inlined_call_operand.vmem [shape: f32[128,32], index: 2, kind: input, shape index: {}]
  %s3 = inlined_call_operand.vmem [shape: f32[2,128], index: 3, kind: output, shape index: {}]
  %s4 = sld [smem:[#allocation0]]
  $region22: #{net_forward.1} parent=0
    _
  %s6 = ssub.s32 1, %s4
  %s7 = scalar_select 0, %s6, %s4
  // Predicated region
  $region2: #{net_forward.1} parent=0 // pred_check
    _
  $region3: #{net_forward.1} parent=0 // pred_check_branch
    %9 = sbr.rel (0) target = $region5
  $region4: #{net_forward.1} parent=0 // pred_region
    _
  $region5: #{net_forward.1} parent=0 // pred_fallthru
    _
  // Predicated region
  $region6: #{net_forward.1} parent=0 // pred_check
    _
  $region7: #{net_forward.1} parent=0 // pred_check_branch
    %11 = sbr.rel (0) target = $region9
  $region8: #{net_forward.1} parent=0 // pred_region
    _
  $region9: #{net_forward.1} parent=0 // pred_fallthru
    _
  // Predicated region
  $region10: #{net_forward.1} parent=0 // pred_check
    _
  $region11: #{net_forward.1} parent=0 // pred_check_branch
    %13 = sbr.rel (0) target = $region13
  $region12: #{net_forward.1} parent=0 // pred_region
    _
  $region13: #{net_forward.1} parent=0 // pred_fallthru
    _
  %v14 = vld [vmem:[%s0] sm:$0x3]
  %v15 = vld [vmem:[%s1] sm:$0xff]
  %v16 = vld [vmem:[%s1 + $0x8] sm:$0xff]
  %v17 = vld [vmem:[%s2] sm:$0xff]
  %v18 = vld [vmem:[%s2 + $0x8] sm:$0xff]
  %v19 = vld [vmem:[%s2 + $0x10] sm:$0xff]
  %v20 = vld [vmem:[%s2 + $0x18] sm:$0xff]
  %v21 = vld [vmem:[%s2 + $0x20] sm:$0xff]
  %v22 = vld [vmem:[%s2 + $0x28] sm:$0xff]
  %v23 = vld [vmem:[%s2 + $0x30] sm:$0xf]
  %v24 = vld [vmem:[%s2 + $0x38] sm:$0xff]
  %v25 = vld [vmem:[%s2 + $0x40] sm:$0xff]
  %v26 = vld [vmem:[%s2 + $0x48] sm:$0xff]
  %v27 = vld [vmem:[%s2 + $0x50] sm:$0xff]
  %v28 = vld [vmem:[%s2 + $0x58] sm:$0xff]
  %v29 = vld [vmem:[%s2 + $0x60] sm:$0xff]
  %v30 = vld [vmem:[%s2 + $0x68] sm:$0xff]
  %v31 = vld [vmem:[%s2 + $0x70] sm:$0xff]
  %v32 = vld [vmem:[%s2 + $0x78] sm:$0x1f]
  %v33 = vlaneseq
  %v34 = vshrl.u32 %v33, 7
  %v35 = vsub.s32 0, %v34
  %v36 = vrot.slane %v32, %v35
  %vm37 = vcmask 130048
  %v39 = vsel %vm37, %v14, 0
  %41 = vmatprep.subr.mxu0 0.0
  %42 = vmatpush1.msra.mxu0 %v17
  %43 = vmatprep.subr.mxu0 0.0
  %44 = vmatpush1.msra.mxu0 %v18
  %45 = vmatprep.subr.mxu0 0.0
  %46 = vmatpush1.msra.mxu0 0.0
  %47 = vmatprep.subr.mxu0 0.0
  %48 = vmatpush1.msra.mxu0 0.0
  %49 = vmatprep.subr.mxu0 0.0
  %50 = vmatpush1.msra.mxu0 0.0
  %51 = vmatprep.subr.mxu0 0.0
  %52 = vmatpush1.msra.mxu0 0.0
  %53 = vmatprep.subr.mxu0 0.0
  %54 = vmatpush1.msra.mxu0 0.0
  %55 = vmatprep.subr.mxu0 0.0
  %56 = vmatpush1.msra.mxu0 0.0
  %57 = vmatprep.subr.mxu0 0.0
  %58 = vmatpush1.msra.mxu0 0.0
  %59 = vmatprep.subr.mxu0 0.0
  %60 = vmatpush1.msra.mxu0 0.0
  %61 = vmatprep.subr.mxu0 0.0
  %62 = vmatpush1.msra.mxu0 0.0
  %63 = vmatprep.subr.mxu0 0.0
  %64 = vmatpush1.msra.mxu0 0.0
  %65 = vmatprep.subr.mxu0 0.0
  %66 = vmatpush1.msra.mxu0 0.0
  %67 = vmatprep.subr.mxu0 0.0
  %68 = vmatpush1.msra.mxu0 0.0
  %69 = vmatprep.subr.mxu0 0.0
  %70 = vmatpush1.msra.mxu0 0.0
  %71 = vmatprep.subr.mxu0 0.0
  %72 = vmatpush1.msra.mxu0 0.0
  %73 = vmatprep.subr.mxu0 0.0
  %74 = vmatpush1.msra.mxu0 0.0
  %75 = vmatprep.subr.mxu0 0.0
  %76 = vmatpush1.msra.mxu0 0.0
  %77 = vmatprep.subr.mxu0 0.0
  %78 = vmatpush1.msra.mxu0 0.0
  %79 = vmatprep.subr.mxu0 0.0
  %80 = vmatpush1.msra.mxu0 0.0
  %81 = vmatprep.subr.mxu0 0.0
  %82 = vmatpush1.msra.mxu0 0.0
  %83 = vmatprep.subr.mxu0 0.0
  %84 = vmatpush1.msra.mxu0 0.0
  %85 = vmatprep.subr.mxu0 0.0
  %86 = vmatpush1.msra.mxu0 0.0
  %87 = vmatprep.subr.mxu0 0.0
  %88 = vmatpush1.msra.mxu0 0.0
  %89 = vmatprep.subr.mxu0 0.0
  %90 = vmatpush1.msra.mxu0 0.0
  %91 = vmatprep.subr.mxu0 0.0
  %92 = vmatpush1.msra.mxu0 0.0
  %93 = vmatprep.subr.mxu0 0.0
  %94 = vmatpush1.msra.mxu0 0.0
  %95 = vmatprep.subr.mxu0 0.0
  %96 = vmatpush1.msra.mxu0 0.0
  %97 = vmatprep.subr.mxu0 0.0
  %98 = vmatpush1.msra.mxu0 0.0
  %99 = vmatprep.subr.mxu0 0.0
  %100 = vmatpush1.msra.mxu0 0.0
  %101 = vmatprep.subr.mxu0 0.0
  %102 = vmatpush1.msra.mxu0 0.0
  %103 = vmatprep.subr.mxu0 0.0
  %104 = vmatpush1.msra.mxu0 0.0
  %105 = vmatprep.mubr.f32.mxu0 0.0
  %106 = vmatmul.mubr.f32.gmra.mrb[0].mxu0 %v39
  %v107 = vpop.f32.mrb[0].mxu0
  %v108 = vadd.f32 %v36, %v107
  %v109 = vpop.f32.mrb[0].mxu0
  %110 = vdwg.mxu0
  %v111 = vmax.f32 %v108, 0.0
  %v112 = vlaneseq
  %v113 = vshrl.u32 %v112, 7
  %v114 = vsub.s32 1, %v113
  %v115 = vrot.slane %v32, %v114
  %vm116 = vcmask 261120
  %v118 = vsel %vm116, %v111, 0
  %120 = vmatprep.subr.mxu0 0.0
  %121 = vmatpush1.msra.mxu0 %v19
  %122 = vmatprep.subr.mxu0 0.0
  %123 = vmatpush1.msra.mxu0 %v20
  %124 = vmatprep.subr.mxu0 0.0
  %125 = vmatpush1.msra.mxu0 %v21
  %126 = vmatprep.subr.mxu0 0.0
  %127 = vmatpush1.msra.mxu0 %v22
  %128 = vmatprep.subr.mxu0 0.0
  %129 = vmatpush1.msra.mxu0 0.0
  %130 = vmatprep.subr.mxu0 0.0
  %131 = vmatpush1.msra.mxu0 0.0
  %132 = vmatprep.subr.mxu0 0.0
  %133 = vmatpush1.msra.mxu0 0.0
  %134 = vmatprep.subr.mxu0 0.0
  %135 = vmatpush1.msra.mxu0 0.0
  %136 = vmatprep.subr.mxu0 0.0
  %137 = vmatpush1.msra.mxu0 0.0
  %138 = vmatprep.subr.mxu0 0.0
  %139 = vmatpush1.msra.mxu0 0.0
  %140 = vmatprep.subr.mxu0 0.0
  %141 = vmatpush1.msra.mxu0 0.0
  %142 = vmatprep.subr.mxu0 0.0
  %143 = vmatpush1.msra.mxu0 0.0
  %144 = vmatprep.subr.mxu0 0.0
  %145 = vmatpush1.msra.mxu0 0.0
  %146 = vmatprep.subr.mxu0 0.0
  %147 = vmatpush1.msra.mxu0 0.0
  %148 = vmatprep.subr.mxu0 0.0
  %149 = vmatpush1.msra.mxu0 0.0
  %150 = vmatprep.subr.mxu0 0.0
  %151 = vmatpush1.msra.mxu0 0.0
  %152 = vmatprep.subr.mxu0 0.0
  %153 = vmatpush1.msra.mxu0 0.0
  %154 = vmatprep.subr.mxu0 0.0
  %155 = vmatpush1.msra.mxu0 0.0
  %156 = vmatprep.subr.mxu0 0.0
  %157 = vmatpush1.msra.mxu0 0.0
  %158 = vmatprep.subr.mxu0 0.0
  %159 = vmatpush1.msra.mxu0 0.0
  %160 = vmatprep.subr.mxu0 0.0
  %161 = vmatpush1.msra.mxu0 0.0
  %162 = vmatprep.subr.mxu0 0.0
  %163 = vmatpush1.msra.mxu0 0.0
  %164 = vmatprep.subr.mxu0 0.0
  %165 = vmatpush1.msra.mxu0 0.0
  %166 = vmatprep.subr.mxu0 0.0
  %167 = vmatpush1.msra.mxu0 0.0
  %168 = vmatprep.subr.mxu0 0.0
  %169 = vmatpush1.msra.mxu0 0.0
  %170 = vmatprep.subr.mxu0 0.0
  %171 = vmatpush1.msra.mxu0 0.0
  %172 = vmatprep.subr.mxu0 0.0
  %173 = vmatpush1.msra.mxu0 0.0
  %174 = vmatprep.subr.mxu0 0.0
  %175 = vmatpush1.msra.mxu0 0.0
  %176 = vmatprep.subr.mxu0 0.0
  %177 = vmatpush1.msra.mxu0 0.0
  %178 = vmatprep.subr.mxu0 0.0
  %179 = vmatpush1.msra.mxu0 0.0
  %180 = vmatprep.subr.mxu0 0.0
  %181 = vmatpush1.msra.mxu0 0.0
  %182 = vmatprep.subr.mxu0 0.0
  %183 = vmatpush1.msra.mxu0 0.0
  %184 = vmatprep.mubr.f32.mxu0 0.0
  %185 = vmatmul.mubr.f32.gmra.mrb[0].mxu0 %v118
  %v186 = vpop.f32.mrb[0].mxu0
  %v187 = vadd.f32 %v115, %v186
  %v188 = vpop.f32.mrb[0].mxu0
  %189 = vdwg.mxu0
  %v190 = vlaneseq
  %v191 = vshrl.u32 %v190, 7
  %v192 = vsub.s32 2, %v191
  %v193 = vrot.slane %v32, %v192
  %vm194 = vcmask 31744
  %v196 = vsel %vm194, %v15, 0
  %v199 = vsel %vm194, %v16, 0
  %vm201 = vcmask 1043456
  %v203 = vsel %vm201, %v23, 0
  %205 = vmatprep.subr.mxu0 0.0
  %206 = vmatpush1.msra.mxu0 %v203
  %207 = vmatprep.subr.mxu0 0.0
  %208 = vmatpush1.msra.mxu0 0.0
  %209 = vmatprep.subr.mxu0 0.0
  %210 = vmatpush1.msra.mxu0 0.0
  %211 = vmatprep.subr.mxu0 0.0
  %212 = vmatpush1.msra.mxu0 0.0
  %213 = vmatprep.subr.mxu0 0.0
  %214 = vmatpush1.msra.mxu0 0.0
  %215 = vmatprep.subr.mxu0 0.0
  %216 = vmatpush1.msra.mxu0 0.0
  %217 = vmatprep.subr.mxu0 0.0
  %218 = vmatpush1.msra.mxu0 0.0
  %219 = vmatprep.subr.mxu0 0.0
  %220 = vmatpush1.msra.mxu0 0.0
  %221 = vmatprep.subr.mxu0 0.0
  %222 = vmatpush1.msra.mxu0 0.0
  %223 = vmatprep.subr.mxu0 0.0
  %224 = vmatpush1.msra.mxu0 0.0
  %225 = vmatprep.subr.mxu0 0.0
  %226 = vmatpush1.msra.mxu0 0.0
  %227 = vmatprep.subr.mxu0 0.0
  %228 = vmatpush1.msra.mxu0 0.0
  %229 = vmatprep.subr.mxu0 0.0
  %230 = vmatpush1.msra.mxu0 0.0
  %231 = vmatprep.subr.mxu0 0.0
  %232 = vmatpush1.msra.mxu0 0.0
  %233 = vmatprep.subr.mxu0 0.0
  %234 = vmatpush1.msra.mxu0 0.0
  %235 = vmatprep.subr.mxu0 0.0
  %236 = vmatpush1.msra.mxu0 0.0
  %237 = vmatprep.subr.mxu0 0.0
  %238 = vmatpush1.msra.mxu0 0.0
  %239 = vmatprep.subr.mxu0 0.0
  %240 = vmatpush1.msra.mxu0 0.0
  %241 = vmatprep.subr.mxu0 0.0
  %242 = vmatpush1.msra.mxu0 0.0
  %243 = vmatprep.subr.mxu0 0.0
  %244 = vmatpush1.msra.mxu0 0.0
  %245 = vmatprep.subr.mxu0 0.0
  %246 = vmatpush1.msra.mxu0 0.0
  %247 = vmatprep.subr.mxu0 0.0
  %248 = vmatpush1.msra.mxu0 0.0
  %249 = vmatprep.subr.mxu0 0.0
  %250 = vmatpush1.msra.mxu0 0.0
  %251 = vmatprep.subr.mxu0 0.0
  %252 = vmatpush1.msra.mxu0 0.0
  %253 = vmatprep.subr.mxu0 0.0
  %254 = vmatpush1.msra.mxu0 0.0
  %255 = vmatprep.subr.mxu0 0.0
  %256 = vmatpush1.msra.mxu0 0.0
  %257 = vmatprep.subr.mxu0 0.0
  %258 = vmatpush1.msra.mxu0 0.0
  %259 = vmatprep.subr.mxu0 0.0
  %260 = vmatpush1.msra.mxu0 0.0
  %261 = vmatprep.subr.mxu0 0.0
  %262 = vmatpush1.msra.mxu0 0.0
  %263 = vmatprep.subr.mxu0 0.0
  %264 = vmatpush1.msra.mxu0 0.0
  %265 = vmatprep.subr.mxu0 0.0
  %266 = vmatpush1.msra.mxu0 0.0
  %267 = vmatprep.subr.mxu0 0.0
  %268 = vmatpush1.msra.mxu0 0.0
  %269 = vmatprep.mubr.f32.mxu0 0.0
  %270 = vmatmul.mubr.f32.gmra.mrb[0].mxu0 %v196
  %v271 = vpop.f32.mrb[0].mxu0
  %v272 = vadd.f32 %v193, %v271
  %v273 = vpop.f32.mrb[0].mxu0
  %274 = vmatprep.mubr.f32.mxu0 0.0
  %275 = vmatmul.mubr.f32.gmra.mrb[0].mxu0 %v199
  %v276 = vpop.f32.mrb[0].mxu0
  %v277 = vadd.f32 %v193, %v276
  %v278 = vpop.f32.mrb[0].mxu0
  %279 = vdwg.mxu0
  %v280 = vmax.f32 %v272, 0.0
  %v281 = vmax.f32 %v277, 0.0
  %v282 = vsel %vm116, %v280, 0.0
  %v283 = vrot.slane %v282, 4
  %v284 = vadd.f32 %v282, %v283
  %v285 = vrot.slane %v284, 2
  %v286 = vadd.f32 %v284, %v285
  %v287 = vrot.slane %v286, 1
  %v288 = vadd.f32 %v286, %v287
  %v289 = vsel %vm116, %v281, 0.0
  %v290 = vrot.slane %v289, 4
  %v291 = vadd.f32 %v289, %v290
  %v292 = vrot.slane %v291, 2
  %v293 = vadd.f32 %v291, %v292
  %v294 = vrot.slane %v293, 1
  %v295 = vadd.f32 %v293, %v294
  %vm296 = vcmask 1040384
  %v297 = vsel %vm296, %v288, %v295
  %v298 = vmul.f32 %v32, 8.0
  %v299 = vlaneseq
  %v300 = vshrl.u32 %v299, 7
  %v301 = vsub.s32 3, %v300
  %v302 = vrot.slane %v298, %v301
  %v304 = vsel %vm116, %v297, 0
  %306 = vmatprep.subr.mxu0 0.0
  %307 = vmatpush1.msra.mxu0 %v24
  %308 = vmatprep.subr.mxu0 0.0
  %309 = vmatpush1.msra.mxu0 %v25
  %310 = vmatprep.subr.mxu0 0.0
  %311 = vmatpush1.msra.mxu0 %v26
  %312 = vmatprep.subr.mxu0 0.0
  %313 = vmatpush1.msra.mxu0 %v27
  %314 = vmatprep.subr.mxu0 0.0
  %315 = vmatpush1.msra.mxu0 0.0
  %316 = vmatprep.subr.mxu0 0.0
  %317 = vmatpush1.msra.mxu0 0.0
  %318 = vmatprep.subr.mxu0 0.0
  %319 = vmatpush1.msra.mxu0 0.0
  %320 = vmatprep.subr.mxu0 0.0
  %321 = vmatpush1.msra.mxu0 0.0
  %322 = vmatprep.subr.mxu0 0.0
  %323 = vmatpush1.msra.mxu0 0.0
  %324 = vmatprep.subr.mxu0 0.0
  %325 = vmatpush1.msra.mxu0 0.0
  %326 = vmatprep.subr.mxu0 0.0
  %327 = vmatpush1.msra.mxu0 0.0
  %328 = vmatprep.subr.mxu0 0.0
  %329 = vmatpush1.msra.mxu0 0.0
  %330 = vmatprep.subr.mxu0 0.0
  %331 = vmatpush1.msra.mxu0 0.0
  %332 = vmatprep.subr.mxu0 0.0
  %333 = vmatpush1.msra.mxu0 0.0
  %334 = vmatprep.subr.mxu0 0.0
  %335 = vmatpush1.msra.mxu0 0.0
  %336 = vmatprep.subr.mxu0 0.0
  %337 = vmatpush1.msra.mxu0 0.0
  %338 = vmatprep.subr.mxu0 0.0
  %339 = vmatpush1.msra.mxu0 0.0
  %340 = vmatprep.subr.mxu0 0.0
  %341 = vmatpush1.msra.mxu0 0.0
  %342 = vmatprep.subr.mxu0 0.0
  %343 = vmatpush1.msra.mxu0 0.0
  %344 = vmatprep.subr.mxu0 0.0
  %345 = vmatpush1.msra.mxu0 0.0
  %346 = vmatprep.subr.mxu0 0.0
  %347 = vmatpush1.msra.mxu0 0.0
  %348 = vmatprep.subr.mxu0 0.0
  %349 = vmatpush1.msra.mxu0 0.0
  %350 = vmatprep.subr.mxu0 0.0
  %351 = vmatpush1.msra.mxu0 0.0
  %352 = vmatprep.subr.mxu0 0.0
  %353 = vmatpush1.msra.mxu0 0.0
  %354 = vmatprep.subr.mxu0 0.0
  %355 = vmatpush1.msra.mxu0 0.0
  %356 = vmatprep.subr.mxu0 0.0
  %357 = vmatpush1.msra.mxu0 0.0
  %358 = vmatprep.subr.mxu0 0.0
  %359 = vmatpush1.msra.mxu0 0.0
  %360 = vmatprep.subr.mxu0 0.0
  %361 = vmatpush1.msra.mxu0 0.0
  %362 = vmatprep.subr.mxu0 0.0
  %363 = vmatpush1.msra.mxu0 0.0
  %364 = vmatprep.subr.mxu0 0.0
  %365 = vmatpush1.msra.mxu0 0.0
  %366 = vmatprep.subr.mxu0 0.0
  %367 = vmatpush1.msra.mxu0 0.0
  %368 = vmatprep.subr.mxu0 0.0
  %369 = vmatpush1.msra.mxu0 0.0
  %370 = vmatprep.mubr.f32.mxu0 0.0
  %371 = vmatmul.mubr.f32.gmra.mrb[0].mxu0 %v304
  %v372 = vpop.f32.mrb[0].mxu0
  %v373 = vadd.f32 %v302, %v372
  %v374 = vpop.f32.mrb[0].mxu0
  %375 = vdwg.mxu0
  %v376 = vlaneseq
  %v377 = vshrl.u32 %v376, 7
  %v378 = vsub.s32 4, %v377
  %v379 = vrot.slane %v32, %v378
  %v381 = vsel %vm116, %v187, 0
  %383 = vmatprep.subr.mxu0 0.0
  %384 = vmatpush1.msra.mxu0 %v28
  %385 = vmatprep.subr.mxu0 0.0
  %386 = vmatpush1.msra.mxu0 %v29
  %387 = vmatprep.subr.mxu0 0.0
  %388 = vmatpush1.msra.mxu0 %v30
  %389 = vmatprep.subr.mxu0 0.0
  %390 = vmatpush1.msra.mxu0 %v31
  %391 = vmatprep.subr.mxu0 0.0
  %392 = vmatpush1.msra.mxu0 0.0
  %393 = vmatprep.subr.mxu0 0.0
  %394 = vmatpush1.msra.mxu0 0.0
  %395 = vmatprep.subr.mxu0 0.0
  %396 = vmatpush1.msra.mxu0 0.0
  %397 = vmatprep.subr.mxu0 0.0
  %398 = vmatpush1.msra.mxu0 0.0
  %399 = vmatprep.subr.mxu0 0.0
  %400 = vmatpush1.msra.mxu0 0.0
  %401 = vmatprep.subr.mxu0 0.0
  %402 = vmatpush1.msra.mxu0 0.0
  %403 = vmatprep.subr.mxu0 0.0
  %404 = vmatpush1.msra.mxu0 0.0
  %405 = vmatprep.subr.mxu0 0.0
  %406 = vmatpush1.msra.mxu0 0.0
  %407 = vmatprep.subr.mxu0 0.0
  %408 = vmatpush1.msra.mxu0 0.0
  %409 = vmatprep.subr.mxu0 0.0
  %410 = vmatpush1.msra.mxu0 0.0
  %411 = vmatprep.subr.mxu0 0.0
  %412 = vmatpush1.msra.mxu0 0.0
  %413 = vmatprep.subr.mxu0 0.0
  %414 = vmatpush1.msra.mxu0 0.0
  %415 = vmatprep.subr.mxu0 0.0
  %416 = vmatpush1.msra.mxu0 0.0
  %417 = vmatprep.subr.mxu0 0.0
  %418 = vmatpush1.msra.mxu0 0.0
  %419 = vmatprep.subr.mxu0 0.0
  %420 = vmatpush1.msra.mxu0 0.0
  %421 = vmatprep.subr.mxu0 0.0
  %422 = vmatpush1.msra.mxu0 0.0
  %423 = vmatprep.subr.mxu0 0.0
  %424 = vmatpush1.msra.mxu0 0.0
  %425 = vmatprep.subr.mxu0 0.0
  %426 = vmatpush1.msra.mxu0 0.0
  %427 = vmatprep.subr.mxu0 0.0
  %428 = vmatpush1.msra.mxu0 0.0
  %429 = vmatprep.subr.mxu0 0.0
  %430 = vmatpush1.msra.mxu0 0.0
  %431 = vmatprep.subr.mxu0 0.0
  %432 = vmatpush1.msra.mxu0 0.0
  %433 = vmatprep.subr.mxu0 0.0
  %434 = vmatpush1.msra.mxu0 0.0
  %435 = vmatprep.subr.mxu0 0.0
  %436 = vmatpush1.msra.mxu0 0.0
  %437 = vmatprep.subr.mxu0 0.0
  %438 = vmatpush1.msra.mxu0 0.0
  %439 = vmatprep.subr.mxu0 0.0
  %440 = vmatpush1.msra.mxu0 0.0
  %441 = vmatprep.subr.mxu0 0.0
  %442 = vmatpush1.msra.mxu0 0.0
  %443 = vmatprep.subr.mxu0 0.0
  %444 = vmatpush1.msra.mxu0 0.0
  %445 = vmatprep.subr.mxu0 0.0
  %446 = vmatpush1.msra.mxu0 0.0
  %447 = vmatprep.mubr.f32.mxu0 0.0
  %448 = vmatmul.mubr.f32.gmra.mrb[0].mxu0 %v381
  %v449 = vpop.f32.mrb[0].mxu0
  %v450 = vadd.f32 %v379, %v449
  %v451 = vpop.f32.mrb[0].mxu0
  %452 = vdwg.mxu0
  %453 = vrot.lane.b32.xlu0 %v187, 32
  %v454 = vpop.permute.xlu0 %453
  %457 = vrot.lane.b32.xlu0 %v373, 64
  %v458 = vpop.permute.xlu0 %457
  %v460 = vsel %vm116, %v450, %v454
  %vm461 = vcmask 523264
  %v462 = vsel %vm461, %v460, %v458
  %vm463 = vcmask 785408
  %v464 = vsel %vm463, %v462, 0.0
  %465 = vst [vmem:[%s3] sm:$0x3] %v464
  // Predicated region
  $region14: #{net_forward.1} parent=0 // pred_check
    _
  $region15: #{net_forward.1} parent=0 // pred_check_branch
    %467 = sbr.rel (0) target = $region17
  $region16: #{net_forward.1} parent=0 // pred_region
    _
  $region17: #{net_forward.1} parent=0 // pred_fallthru
    _
  // Predicated region
  $region18: #{net_forward.1} parent=0 // pred_check
    _
  $region19: #{net_forward.1} parent=0 // pred_check_branch
    %469 = sbr.rel (0) target = $region21
  $region20: #{net_forward.1} parent=0 // pred_region
    _
  $region21: #{net_forward.1} parent=0 // pred_fallthru
    _

</llo_original>
